<compile_context>
chip_gen: v6e
topology: v6e:2x2x1
jax: 0.10.0
libtpu: 0.0.40
codegen_flags: <defaults>
</compile_context>

<pallas_src>
import jax
import jax.numpy as jnp
from jax.experimental import pallas as pl
from jax.experimental.pallas import tpu as pltpu


def _copy_kernel(x_ref, o_ref):
    # Pure 2D copy of a lane-dense (tn, tf) tile; the flatten happened as a
    # zero-cost reshape in the wrapper.
    o_ref[...] = x_ref[...]


def _pick_tile(extent: int, target: int, align: int) -> int:
    """Tile size: full extent if small (escape hatch), else aligned target."""
    if extent <= target:
        return extent
    return max(align, (target // align) * align)


def flatten(x: jax.Array) -> jax.Array:
    """Pallas equivalent of torch `x.view(x.size(0), -1)` for NCHW input."""
    n = x.shape[0]
    flat = 1
    for d in x.shape[1:]:
        flat *= d

    # Free metadata-only reshape to a lane-dense 2D view.
    x2 = x.reshape(n, flat)

    # Conservative tiles: 2 double-buffered (in + out) f32 tiles of
    # (256, 2048) are ~8 MiB total -> fits v5e's 16 MiB scoped default,
    # v6e/v7x defaults, and leaves headroom on v7x's 64 MiB physical VMEM.
    tn = _pick_tile(n, 256, 8)       # sublane-aligned batch tile
    tf = _pick_tile(flat, 2048, 128)  # lane-dense feature tile

    grid = (pl.cdiv(n, tn), pl.cdiv(flat, tf))

    return pl.pallas_call(
        _copy_kernel,
        out_shape=jax.ShapeDtypeStruct((n, flat), x.dtype),
        grid=grid,
        in_specs=[pl.BlockSpec((tn, tf), lambda i, j: (i, j))],
        out_specs=pl.BlockSpec((tn, tf), lambda i, j: (i, j)),
        compiler_params=pltpu.CompilerParams(
            dimension_semantics=("parallel", "parallel"),
        ),
        cost_estimate=pl.CostEstimate(
            flops=0,
            transcendentals=0,
            bytes_accessed=2 * x.size * x.dtype.itemsize,
        ),
    )(x2)


if __name__ == "__main__":
    key = jax.random.PRNGKey(0)
    # Small NCHW input consistent with a convnet feature map: (N=2, C=4, H=16, W=16)
    x = jax.random.normal(key, (2, 4, 16, 16), dtype=jnp.float32)

    y = flatten(x)
    jax.block_until_ready(y)

    # Correctness check against plain JAX reshape (== torch .view(N, -1)).
    y_ref = x.reshape(x.shape[0], -1)
    assert y.shape == (2, 4 * 16 * 16), y.shape
    assert y.dtype == x.dtype
    assert jnp.array_equal(y, y_ref)

    print("KERNEL_OK")
</pallas_src>

<mosaic_0001>
module attributes {stable_mosaic.version = 11 : i64} {
  func.func @_copy_kernel(%arg0: i32, %arg1: i32, %arg2: memref<2x1024xf32, #tpu.memory_space<vmem>>, %arg3: memref<2x1024xf32, #tpu.memory_space<vmem>>) attributes {dimension_semantics = [#tpu.dimension_semantics<parallel>, #tpu.dimension_semantics<parallel>], iteration_bounds = array<i64: 1, 1>, scalar_prefetch = 0 : i64, scratch_operands = 0 : i64, tpu.core_type = #tpu.core_type<tc>, window_params = [{transform_indices = @transform_0, window_bounds = array<i64: 2, 1024>}, {transform_indices = @transform_1, window_bounds = array<i64: 2, 1024>}]} {
    %c0 = arith.constant 0 : index
    %c0_0 = arith.constant 0 : index
    %0 = vector.load %arg2[%c0, %c0_0] : memref<2x1024xf32, #tpu.memory_space<vmem>>, vector<2x1024xf32>
    %c0_1 = arith.constant 0 : index
    %c0_2 = arith.constant 0 : index
    %1 = vector.load %arg3[%c0_1, %c0_2] : memref<2x1024xf32, #tpu.memory_space<vmem>>, vector<2x1024xf32>
    tpu.vector_store %arg3[%c0_1, %c0_2], %0 {strides = array<i32>} : memref<2x1024xf32, #tpu.memory_space<vmem>>, vector<2x1024xf32>,
    return
  }
  func.func @transform_0(%arg0: i32, %arg1: i32) -> (i32, i32) {
    %c0_i32 = arith.constant 0 : i32
    return %arg0, %arg1 : i32, i32
  }
  func.func @transform_1(%arg0: i32, %arg1: i32) -> (i32, i32) {
    %c0_i32 = arith.constant 0 : i32
    return %arg0, %arg1 : i32, i32
  }
}

</mosaic_0001>

<llo_original>
// kernel: tpu_custom_call.1
$region0: #{tpu_custom_call.1}
  #allocation0 [shape = 'u32[]', space=smem, size = 0x4, offset = 0x4, fixed_abs, tag = 'smem constant byte address 0x4 - core index']
  #allocation1 [shape = 'u32[144,128]{1,0:T(1,128)}', space=vmem, size = 0x12000, scoped, tag = 'internal scratch']
  %s0 = inlined_call_operand.hbm [shape: f32[2,1024], index: 0, kind: input, shape index: {}]
  %s1 = inlined_call_operand.hbm [shape: f32[2,1024], index: 1, kind: output, shape index: {}]
  %s2 = sld [smem:[#allocation0]]
  $region18: #{tpu_custom_call.1} parent=0
    _
  %s4 = ssub.s32 1, %s2
  %s5 = scalar_select 0, %s4, %s2
  $region1: #{tpu_custom_call.1} parent=0
    #allocation2 [shape = 'u8[8192]{0}', space=vmem, size = 0x2000, scoped, tag = 'input window, operand 0, single buffered']
    #allocation3 [shape = 's32[1]{0}', space=sflag, size = 0x4, scoped, tag = 'scoped memory for tpu_custom_call.1']
    #allocation4 [shape = 's32[1]{0}', space=sflag, size = 0x4, scoped, tag = 'scoped memory for tpu_custom_call.1']
    #allocation5 [shape = 'u8[8192]{0}', space=vmem, size = 0x2000, scoped, tag = 'output window, operand 0, single buffered']
    %6 = vsyncpa [#allocation3], 0
    %7 = vsyncpa [#allocation4], 0
    // Predicated region
    $region2: #{tpu_custom_call.1} parent=1 // pred_check
      _
    $region3: #{tpu_custom_call.1} parent=1 // pred_check_branch
      %9 = sbr.rel (0) target = $region5
    $region4: #{tpu_custom_call.1} parent=1 // pred_region
      %s11 = ssub.s32 256, 256
      %12 = vsyncadd [#allocation3], %s11
      %s14 = sshll.u32 [#allocation2], 4
      %s15 = int_to_ptr.vmem [resolvable:$true] %s14
      %17 = dma.hbm_to_vmem [thread:$0]  %s0, 256, %s15, [#allocation3]
    $region5: #{tpu_custom_call.1} parent=1 // pred_fallthru
      _
    // Predicated region
    $region6: #{tpu_custom_call.1} parent=1 // pred_check
      _
    $region7: #{tpu_custom_call.1} parent=1 // pred_check_branch
      %19 = sbr.rel (0) target = $region9
    $region8: #{tpu_custom_call.1} parent=1 // pred_region
      %20 = dma.done [#allocation3], 256
    $region9: #{tpu_custom_call.1} parent=1 // pred_fallthru
      _
    %v21 = vld [vmem:[#allocation2] sm:$0xff]
    %v22 = vld [vmem:[#allocation2 + $0x8] sm:$0xff]
    %23 = vst [vmem:[#allocation5] sm:$0xff] %v21
    %24 = vst [vmem:[#allocation5 + $0x8] sm:$0xff] %v22
    // Predicated region
    $region10: #{tpu_custom_call.1} parent=1 // pred_check
      _
    $region11: #{tpu_custom_call.1} parent=1 // pred_check_branch
      %26 = sbr.rel (0) target = $region13
    $region12: #{tpu_custom_call.1} parent=1 // pred_region
      %s28 = ssub.s32 256, 256
      %29 = vsyncadd [#allocation4], %s28
      %s31 = sshll.u32 [#allocation5], 4
      %s32 = int_to_ptr.vmem [resolvable:$true] %s31
      %34 = dma.vmem_to_hbm [thread:$0]  %s32, 256, %s1, [#allocation4]
    $region13: #{tpu_custom_call.1} parent=1 // pred_fallthru
      _
    // Predicated region
    $region14: #{tpu_custom_call.1} parent=1 // pred_check
      _
    $region15: #{tpu_custom_call.1} parent=1 // pred_check_branch
      %36 = sbr.rel (0) target = $region17
    $region16: #{tpu_custom_call.1} parent=1 // pred_region
      %37 = dma.done [#allocation4], 256
    $region17: #{tpu_custom_call.1} parent=1 // pred_fallthru
      _
    %38 = vsyncpa [#allocation3], 1
    %39 = vsyncpa [#allocation4], 1

</llo_original>
